<compile_context>
chip_gen: v7x
topology: tpu7x:2x2x1
jax: 0.10.0
libtpu: 0.0.40
codegen_flags: <defaults>
</compile_context>

<pallas_src>
import jax
import jax.numpy as jnp
from jax.experimental import pallas as pl
from jax.experimental.pallas import tpu as pltpu

_LANES = 128
# exp(-1e4) underflows to exactly 0 in f32, so a masked row contributes exactly
# 0 to every sum (masking happens after the f32 cast, so dtype range is moot).
_MASK_FILL = -1.0e4


def _round_up(v, m):
    return ((v + m - 1) // m) * m


def _sublane_min(dtype):
    # f32 -> 8, bf16/f16 -> 16, int8/fp8/bool -> 32 (packed sublane tiles).
    return max(8, 32 // jnp.dtype(dtype).itemsize)


def _jax_partial_sums(x, t):
    """Pure-JAX reduction of a small ragged tail: [sum_bce, sum_p, sum_t, sum_pt]."""
    x = x.astype(jnp.float32)
    t = t.astype(jnp.float32)
    p = jax.nn.sigmoid(x)
    bce = jnp.maximum(x, 0.0) - x * t + jnp.log1p(jnp.exp(-jnp.abs(x)))
    return jnp.stack([jnp.sum(bce), jnp.sum(p), jnp.sum(t), jnp.sum(p * t)])


def _make_loss_sums_kernel(tile_rows, rows, num_blocks, blocks_per_core,
                           has_tail, has_oob):
    sub_blocks = tile_rows // 8

    def _accumulate(x_ref, t_ref, out_ref, row0=None):
        x = x_ref[...].astype(jnp.float32)
        t = t_ref[...].astype(jnp.float32)

        if row0 is not None:
            # Only the single ragged tail block pays for the mask.
            local = jax.lax.broadcasted_iota(jnp.int32, x.shape, 0)
            valid = (row0 + local) < rows
            x = jnp.where(valid, x, _MASK_FILL)
            t = jnp.where(valid, t, 0.0)

        # One shared exp feeds both stable BCE-with-logits and sigmoid.
        e = jnp.exp(-jnp.abs(x))
        inv = pl.reciprocal(1.0 + e, approx=True)        # EUP slot, not VALU
        p = jnp.where(x >= 0.0, inv, e * inv)            # sigmoid(x)
        # stable BCE-with-logits: max(x,0) - x*t + log1p(exp(-|x|))
        bce = jnp.maximum(x, 0.0) - x * t + jnp.log1p(e)

        def red(v):                                      # (tile_rows,128)->(8,128)
            return v.reshape(sub_blocks, 8, _LANES).sum(axis=0)

        out_ref[0] += red(bce)
        out_ref[1] += red(p)
        out_ref[2] += red(t)
        out_ref[3] += red(p * t)

    def kernel(x_ref, t_ref, out_ref):
        c = pl.program_id(0)   # core-split axis ("parallel")
        i = pl.program_id(1)   # per-core reduction steps ("arbitrary")

        @pl.when(i == 0)
        def _():
            out_ref[...] = jnp.zeros_like(out_ref)

        b = c * blocks_per_core + i            # logical block id (unclamped)

        if not (has_tail or has_oob):
            _accumulate(x_ref, t_ref, out_ref)
        else:
            full_blocks = num_blocks - 1 if has_tail else num_blocks

            @pl.when(b < full_blocks)
            def _():
                _accumulate(x_ref, t_ref, out_ref)       # mask-free fast path

            if has_tail:
                @pl.when(b == num_blocks - 1)
                def _():
                    _accumulate(x_ref, t_ref, out_ref,
                                row0=(num_blocks - 1) * tile_rows)
            # b >= num_blocks (clamped duplicate from an uneven core split):
            # the DMA re-uses the previous block (same index) and compute is
            # skipped, so nothing is double counted.

    return kernel


def _pallas_loss_sums(pred, target):
    """Returns f32[4] = [sum_bce, sum_sigmoid, sum_target, sum_sigmoid*target]."""
    xf = pred.reshape(-1)      # native dtype; kernel casts tiles to f32
    tf = target.reshape(-1)
    total = xf.shape[0]

    lane_tail = total % _LANES
    main = total - lane_tail

    sums = jnp.zeros((4,), jnp.float32)
    if lane_tail:
        # <128 ragged elements: reduce in glue (no padding concatenate).
        sums = sums + _jax_partial_sums(xf[main:], tf[main:])
    if main == 0:
        return sums

    rows = main // _LANES
    x2 = xf[:main].reshape(rows, _LANES)
    t2 = tf[:main].reshape(rows, _LANES)

    xi = jnp.dtype(x2.dtype).itemsize
    ti = jnp.dtype(t2.dtype).itemsize
    sub = max(_sublane_min(x2.dtype), _sublane_min(t2.dtype))

    # Tile selection: double-buffered inputs capped at ~32 MiB of VMEM
    # (16384 f32 rows -> 8 MiB per input block), rounded to the dtype sublane
    # minimum; aim for >=2 blocks so the 2-way core split can engage.
    budget_rows = max(sub, ((32 << 20) // (2 * _LANES * (xi + ti)) // sub) * sub)
    want_blocks = 2 if rows > 2 * sub else 1
    tile_rows = max(sub, min(budget_rows,
                             _round_up(pl.cdiv(rows, want_blocks), sub)))

    num_blocks = pl.cdiv(rows, tile_rows)
    num_cores = 2 if num_blocks >= 2 else 1
    blocks_per_core = pl.cdiv(num_blocks, num_cores)

    has_tail = num_blocks * tile_rows != rows
    has_oob = num_cores * blocks_per_core > num_blocks
    last_block = num_blocks - 1

    def in_map(c, i):
        b = c * blocks_per_core + i
        if has_oob:
            b = jnp.minimum(b, last_block)   # duplicate -> DMA reused, compute skipped
        return (b, 0)

    kernel = _make_loss_sums_kernel(tile_rows, rows, num_blocks,
                                    blocks_per_core, has_tail, has_oob)

    partials = pl.pallas_call(
        kernel,
        out_shape=jax.ShapeDtypeStruct((num_cores, 4, 8, _LANES), jnp.float32),
        grid_spec=pltpu.PrefetchScalarGridSpec(
            num_scalar_prefetch=0,
            grid=(num_cores, blocks_per_core),
            in_specs=[
                pl.BlockSpec((tile_rows, _LANES), in_map),
                pl.BlockSpec((tile_rows, _LANES), in_map),
            ],
            # Per-core resident accumulator: 4 quantities x one full (8,128) vreg.
            out_specs=pl.BlockSpec((None, 4, 8, _LANES), lambda c, i: (c, 0, 0, 0)),
        ),
        compiler_params=pltpu.CompilerParams(
            dimension_semantics=("parallel", "arbitrary"),
            vmem_limit_bytes=48 * 1024 * 1024,
        ),
    )(x2, t2)

    # Tiny cross-core + cross-sublane + cross-lane reduction in JAX glue.
    return sums + jnp.sum(partials, axis=(0, 2, 3))


def combined_loss(pred, target,
                  alpha=0.4, beta=0.3, gamma=0.2, delta=0.1,
                  focal_alpha=0.25, focal_gamma=2.0,
                  tversky_alpha=0.5, tversky_beta=0.5):
    """Pallas-backed equivalent of CombinedLoss.forward (scalar f32)."""
    n = pred.size
    sums = _pallas_loss_sums(pred, target)
    sum_bce, sum_p, sum_t, sum_pt = sums[0], sums[1], sums[2], sums[3]
    smooth = 1.0

    # BCEWithLogitsLoss (mean reduction)
    bce = sum_bce / n

    # DiceLoss
    dice = 1.0 - (2.0 * sum_pt + smooth) / (sum_p + sum_t + smooth)

    # FocalLoss (built on the same mean BCE, matching the reference module)
    pt = jnp.exp(-bce)
    focal = focal_alpha * (1.0 - pt) ** focal_gamma * bce

    # TverskyLoss
    fps = sum_p - sum_pt          # sum(pred * (1 - target))
    fns = sum_t - sum_pt          # sum((1 - pred) * target)
    tversky = 1.0 - (sum_pt + smooth) / (
        sum_pt + tversky_alpha * fps + tversky_beta * fns + smooth)

    return alpha * bce + beta * dice + gamma * focal + delta * tversky


def _reference_combined_loss(pred, target):
    """Pure-JAX reference mirroring the PyTorch math (for sanity checking)."""
    x = pred.astype(jnp.float32)
    t = target.astype(jnp.float32)
    p = jax.nn.sigmoid(x)
    bce = jnp.mean(jnp.maximum(x, 0.0) - x * t + jnp.log1p(jnp.exp(-jnp.abs(x))))
    inter = jnp.sum(p * t)
    dice = 1.0 - (2.0 * inter + 1.0) / (jnp.sum(p) + jnp.sum(t) + 1.0)
    focal = 0.25 * (1.0 - jnp.exp(-bce)) ** 2 * bce
    fps = jnp.sum(p * (1.0 - t))
    fns = jnp.sum((1.0 - p) * t)
    tversky = 1.0 - (inter + 1.0) / (inter + 0.5 * fps + 0.5 * fns + 1.0)
    return 0.4 * bce + 0.3 * dice + 0.2 * focal + 0.1 * tversky


if __name__ == "__main__":
    key = jax.random.PRNGKey(0)
    k1, k2, k3, k4 = jax.random.split(key, 4)

    # Small segmentation-style shapes: (batch=2, channels=4, H=16, W=16).
    pred = jax.random.normal(k1, (2, 4, 16, 16), dtype=jnp.float32)
    target = (jax.random.uniform(k2, (2, 4, 16, 16)) > 0.5).astype(jnp.float32)

    loss = jax.jit(combined_loss)(pred, target)
    loss = jax.block_until_ready(loss)
    ref = _reference_combined_loss(pred, target)
    # approx=True reciprocal -> slightly looser tolerance than exact f32.
    assert jnp.allclose(loss, ref, rtol=5e-3, atol=5e-3), (loss, ref)

    # Second case exercising the ragged paths (lane tail + masked row tail)
    # and a native bf16 target.
    pred2 = jax.random.normal(k3, (3, 5, 7, 11), dtype=jnp.float32)
    target2 = (jax.random.uniform(k4, (3, 5, 7, 11)) > 0.5).astype(jnp.bfloat16)
    loss2 = jax.jit(combined_loss)(pred2, target2)
    loss2 = jax.block_until_ready(loss2)
    ref2 = _reference_combined_loss(pred2, target2)
    assert jnp.allclose(loss2, ref2, rtol=5e-3, atol=5e-3), (loss2, ref2)

    print("KERNEL_OK")
</pallas_src>

<mosaic_0001>
module attributes {stable_mosaic.version = 11 : i64} {
  func.func @kernel(%arg0: i32, %arg1: i32, %arg2: memref<16x128xf32, #tpu.memory_space<vmem>>, %arg3: memref<16x128xf32, #tpu.memory_space<vmem>>, %arg4: memref<1x4x8x128xf32, #tpu.memory_space<vmem>>) attributes {dimension_semantics = [#tpu.dimension_semantics<parallel>, #tpu.dimension_semantics<arbitrary>], iteration_bounds = array<i64: 1, 1>, scalar_prefetch = 0 : i64, scratch_operands = 0 : i64, tpu.core_type = #tpu.core_type<tc>, window_params = [{transform_indices = @transform_0, window_bounds = array<i64: 16, 128>}, {transform_indices = @transform_1, window_bounds = array<i64: 16, 128>}, {transform_indices = @transform_2, window_bounds = array<i64: 1, 4, 8, 128>}]} {
    %c0_i32 = arith.constant 0 : i32
    %0 = arith.cmpi eq, %arg1, %c0_i32 : i32
    %1 = arith.extui %0 : i1 to i32
    %c0_i32_0 = arith.constant 0 : i32
    %2 = arith.cmpi ne, %1, %c0_i32_0 : i32
    scf.if %2 {
      %cst_40 = arith.constant 0.000000e+00 : f32
      %55 = vector.broadcast %cst_40 : f32 to vector<4x8x128xf32>
      %c0_41 = arith.constant 0 : index
      %c0_42 = arith.constant 0 : index
      %c0_43 = arith.constant 0 : index
      %c0_44 = arith.constant 0 : index
      %56 = vector.load %arg4[%c0_41, %c0_42, %c0_43, %c0_44] : memref<1x4x8x128xf32, #tpu.memory_space<vmem>>, vector<1x4x8x128xf32>
      %57 = vector.shape_cast %56 : vector<1x4x8x128xf32> to vector<4x8x128xf32>
      %58 = vector.shape_cast %55 : vector<4x8x128xf32> to vector<1x4x8x128xf32>
      tpu.vector_store %arg4[%c0_41, %c0_42, %c0_43, %c0_44], %58 {strides = array<i32>} : memref<1x4x8x128xf32, #tpu.memory_space<vmem>>, vector<1x4x8x128xf32>,
    } else {
    }
    %c0 = arith.constant 0 : index
    %c0_1 = arith.constant 0 : index
    %3 = vector.load %arg2[%c0, %c0_1] : memref<16x128xf32, #tpu.memory_space<vmem>>, vector<16x128xf32>
    %c0_2 = arith.constant 0 : index
    %c0_3 = arith.constant 0 : index
    %4 = vector.load %arg3[%c0_2, %c0_3] : memref<16x128xf32, #tpu.memory_space<vmem>>, vector<16x128xf32>
    %5 = math.absf %3 : vector<16x128xf32>
    %cst = arith.constant 0.000000e+00 : f32
    %6 = vector.broadcast %cst : f32 to vector<16x128xf32>
    %7 = arith.subf %6, %5 : vector<16x128xf32>
    %8 = math.exp %7 : vector<16x128xf32>
    %cst_4 = arith.constant 1.000000e+00 : f32
    %9 = vector.broadcast %cst_4 : f32 to vector<16x128xf32>
    %10 = arith.addf %9, %8 : vector<16x128xf32>
    %11 = tpu.reciprocal %10 {approx = true} : vector<16x128xf32> -> vector<16x128xf32>
    %cst_5 = arith.constant 0.000000e+00 : f32
    %12 = vector.broadcast %cst_5 : f32 to vector<16x128xf32>
    %13 = arith.cmpf oge, %3, %12 : vector<16x128xf32>
    %14 = arith.mulf %8, %11 : vector<16x128xf32>
    %15 = arith.select %13, %11, %14 : vector<16x128xi1>, vector<16x128xf32>
    %cst_6 = arith.constant 0.000000e+00 : f32
    %16 = vector.broadcast %cst_6 : f32 to vector<16x128xf32>
    %17 = arith.maximumf %3, %16 : vector<16x128xf32>
    %18 = arith.mulf %3, %4 : vector<16x128xf32>
    %19 = arith.subf %17, %18 : vector<16x128xf32>
    %20 = math.log1p %8 : vector<16x128xf32>
    %21 = arith.addf %19, %20 : vector<16x128xf32>
    %c0_7 = arith.constant 0 : index
    %c0_8 = arith.constant 0 : index
    %c0_9 = arith.constant 0 : index
    %c0_10 = arith.constant 0 : index
    %22 = vector.load %arg4[%c0_7, %c0_8, %c0_9, %c0_10] : memref<1x4x8x128xf32, #tpu.memory_space<vmem>>, vector<1x1x8x128xf32>
    %23 = vector.shape_cast %22 : vector<1x1x8x128xf32> to vector<8x128xf32>
    %24 = vector.shape_cast %21 : vector<16x128xf32> to vector<2x8x128xf32>
    %cst_11 = arith.constant dense<0.000000e+00> : vector<8x128xf32>
    %25 = vector.multi_reduction <add>, %24, %cst_11 [0] : vector<2x8x128xf32> to vector<8x128xf32>
    %26 = arith.addf %23, %25 : vector<8x128xf32>
    %c0_12 = arith.constant 0 : index
    %c0_13 = arith.constant 0 : index
    %c0_14 = arith.constant 0 : index
    %c0_15 = arith.constant 0 : index
    %27 = vector.load %arg4[%c0_12, %c0_13, %c0_14, %c0_15] : memref<1x4x8x128xf32, #tpu.memory_space<vmem>>, vector<1x1x8x128xf32>
    %28 = vector.shape_cast %27 : vector<1x1x8x128xf32> to vector<8x128xf32>
    %29 = vector.shape_cast %26 : vector<8x128xf32> to vector<1x1x8x128xf32>
    tpu.vector_store %arg4[%c0_12, %c0_13, %c0_14, %c0_15], %29 {strides = array<i32>} : memref<1x4x8x128xf32, #tpu.memory_space<vmem>>, vector<1x1x8x128xf32>,
    %c0_16 = arith.constant 0 : index
    %c1 = arith.constant 1 : index
    %c0_17 = arith.constant 0 : index
    %c0_18 = arith.constant 0 : index
    %30 = vector.load %arg4[%c0_16, %c1, %c0_17, %c0_18] : memref<1x4x8x128xf32, #tpu.memory_space<vmem>>, vector<1x1x8x128xf32>
    %31 = vector.shape_cast %30 : vector<1x1x8x128xf32> to vector<8x128xf32>
    %32 = vector.shape_cast %15 : vector<16x128xf32> to vector<2x8x128xf32>
    %cst_19 = arith.constant dense<0.000000e+00> : vector<8x128xf32>
    %33 = vector.multi_reduction <add>, %32, %cst_19 [0] : vector<2x8x128xf32> to vector<8x128xf32>
    %34 = arith.addf %31, %33 : vector<8x128xf32>
    %c0_20 = arith.constant 0 : index
    %c1_21 = arith.constant 1 : index
    %c0_22 = arith.constant 0 : index
    %c0_23 = arith.constant 0 : index
    %35 = vector.load %arg4[%c0_20, %c1_21, %c0_22, %c0_23] : memref<1x4x8x128xf32, #tpu.memory_space<vmem>>, vector<1x1x8x128xf32>
    %36 = vector.shape_cast %35 : vector<1x1x8x128xf32> to vector<8x128xf32>
    %37 = vector.shape_cast %34 : vector<8x128xf32> to vector<1x1x8x128xf32>
    tpu.vector_store %arg4[%c0_20, %c1_21, %c0_22, %c0_23], %37 {strides = array<i32>} : memref<1x4x8x128xf32, #tpu.memory_space<vmem>>, vector<1x1x8x128xf32>,
    %c0_24 = arith.constant 0 : index
    %c2 = arith.constant 2 : index
    %c0_25 = arith.constant 0 : index
    %c0_26 = arith.constant 0 : index
    %38 = vector.load %arg4[%c0_24, %c2, %c0_25, %c0_26] : memref<1x4x8x128xf32, #tpu.memory_space<vmem>>, vector<1x1x8x128xf32>
    %39 = vector.shape_cast %38 : vector<1x1x8x128xf32> to vector<8x128xf32>
    %40 = vector.shape_cast %4 : vector<16x128xf32> to vector<2x8x128xf32>
    %cst_27 = arith.constant dense<0.000000e+00> : vector<8x128xf32>
    %41 = vector.multi_reduction <add>, %40, %cst_27 [0] : vector<2x8x128xf32> to vector<8x128xf32>
    %42 = arith.addf %39, %41 : vector<8x128xf32>
    %c0_28 = arith.constant 0 : index
    %c2_29 = arith.constant 2 : index
    %c0_30 = arith.constant 0 : index
    %c0_31 = arith.constant 0 : index
    %43 = vector.load %arg4[%c0_28, %c2_29, %c0_30, %c0_31] : memref<1x4x8x128xf32, #tpu.memory_space<vmem>>, vector<1x1x8x128xf32>
    %44 = vector.shape_cast %43 : vector<1x1x8x128xf32> to vector<8x128xf32>
    %45 = vector.shape_cast %42 : vector<8x128xf32> to vector<1x1x8x128xf32>
    tpu.vector_store %arg4[%c0_28, %c2_29, %c0_30, %c0_31], %45 {strides = array<i32>} : memref<1x4x8x128xf32, #tpu.memory_space<vmem>>, vector<1x1x8x128xf32>,
    %c0_32 = arith.constant 0 : index
    %c3 = arith.constant 3 : index
    %c0_33 = arith.constant 0 : index
    %c0_34 = arith.constant 0 : index
    %46 = vector.load %arg4[%c0_32, %c3, %c0_33, %c0_34] : memref<1x4x8x128xf32, #tpu.memory_space<vmem>>, vector<1x1x8x128xf32>
    %47 = vector.shape_cast %46 : vector<1x1x8x128xf32> to vector<8x128xf32>
    %48 = arith.mulf %15, %4 : vector<16x128xf32>
    %49 = vector.shape_cast %48 : vector<16x128xf32> to vector<2x8x128xf32>
    %cst_35 = arith.constant dense<0.000000e+00> : vector<8x128xf32>
    %50 = vector.multi_reduction <add>, %49, %cst_35 [0] : vector<2x8x128xf32> to vector<8x128xf32>
    %51 = arith.addf %47, %50 : vector<8x128xf32>
    %c0_36 = arith.constant 0 : index
    %c3_37 = arith.constant 3 : index
    %c0_38 = arith.constant 0 : index
    %c0_39 = arith.constant 0 : index
    %52 = vector.load %arg4[%c0_36, %c3_37, %c0_38, %c0_39] : memref<1x4x8x128xf32, #tpu.memory_space<vmem>>, vector<1x1x8x128xf32>
    %53 = vector.shape_cast %52 : vector<1x1x8x128xf32> to vector<8x128xf32>
    %54 = vector.shape_cast %51 : vector<8x128xf32> to vector<1x1x8x128xf32>
    tpu.vector_store %arg4[%c0_36, %c3_37, %c0_38, %c0_39], %54 {strides = array<i32>} : memref<1x4x8x128xf32, #tpu.memory_space<vmem>>, vector<1x1x8x128xf32>,
    return
  }
  func.func @transform_0(%arg0: i32, %arg1: i32) -> (i32, i32) {
    %c1_i32 = arith.constant 1 : i32
    %0 = arith.muli %arg0, %c1_i32 : i32
    %1 = arith.addi %0, %arg1 : i32
    %c0_i32 = arith.constant 0 : i32
    %c0_i32_0 = arith.constant 0 : i32
    return %1, %c0_i32 : i32, i32
  }
  func.func @transform_1(%arg0: i32, %arg1: i32) -> (i32, i32) {
    %c1_i32 = arith.constant 1 : i32
    %0 = arith.muli %arg0, %c1_i32 : i32
    %1 = arith.addi %0, %arg1 : i32
    %c0_i32 = arith.constant 0 : i32
    %c0_i32_0 = arith.constant 0 : i32
    return %1, %c0_i32 : i32, i32
  }
  func.func @transform_2(%arg0: i32, %arg1: i32) -> (i32, i32, i32, i32) {
    %c0_i32 = arith.constant 0 : i32
    %c0_i32_0 = arith.constant 0 : i32
    %c0_i32_1 = arith.constant 0 : i32
    %c0_i32_2 = arith.constant 0 : i32
    return %arg0, %c0_i32, %c0_i32_0, %c0_i32_1 : i32, i32, i32, i32
  }
}

</mosaic_0001>

<llo_original>
// kernel: combined_loss.1
$region0: #{combined_loss.1}
  #allocation0 [shape = 'u32[]', space=smem, size = 0x4, offset = 0x4, fixed_abs, tag = 'smem constant byte address 0x4 - core index']
  #allocation1 [shape = 'u32[144,128]{1,0:T(1,128)}', space=vmem, size = 0x12000, scoped, tag = 'internal scratch']
  %s0 = inlined_call_operand.vmem [shape: f32[16,128], index: 0, kind: input, shape index: {}]
  %s1 = inlined_call_operand.vmem [shape: f32[16,128], index: 1, kind: input, shape index: {}]
  %s2 = inlined_call_operand.vmem [shape: f32[1,4,8,128], index: 2, kind: output, shape index: {}]
  %s3 = sld [smem:[#allocation0]]
  $region22: #{combined_loss.1} parent=0
    _
  %s5 = ssub.s32 1, %s3
  %s6 = scalar_select 0, %s5, %s3
  // Predicated region
  $region2: #{combined_loss.1} parent=0 // pred_check
    _
  $region3: #{combined_loss.1} parent=0 // pred_check_branch
    %8 = sbr.rel (0) target = $region5
  $region4: #{combined_loss.1} parent=0 // pred_region
    %s9 = sadd.s32 0, 0
    %s10 = smul.u32 2, %s9
    %p11 = scmp.lt.s32.totalorder %s10, 1
    %s12 = scalar_select %p11, %s10, 1
    %s13 = smul.addr %s12, 8
    %s14 = scalar_lea.vmem %s0, %s13
    %s15 = sadd.s32 0, 0
    %s16 = smul.u32 2, %s15
  $region5: #{combined_loss.1} parent=0 // pred_fallthru
    _
  // Predicated region
  $region6: #{combined_loss.1} parent=0 // pred_check
    _
  $region7: #{combined_loss.1} parent=0 // pred_check_branch
    %18 = sbr.rel (0) target = $region9
  $region8: #{combined_loss.1} parent=0 // pred_region
    %s19 = sadd.s32 0, 0
    %s20 = smul.u32 2, %s19
    %p21 = scmp.lt.s32.totalorder %s20, 1
    %s22 = scalar_select %p21, %s20, 1
    %s23 = smul.addr %s22, 8
    %s24 = scalar_lea.vmem %s1, %s23
    %s25 = sadd.s32 0, 0
    %s26 = smul.u32 2, %s25
  $region9: #{combined_loss.1} parent=0 // pred_fallthru
    _
  %s27 = sadd.s32 0, 0
  %s28 = smul.u32 2, %s27
  %p29 = scmp.lt.s32.totalorder %s28, 1
  %s30 = scalar_select %p29, %s28, 1
  %s31 = smul.addr %s30, 8
  %s32 = scalar_lea.vmem %s0, %s31
  %s33 = sadd.s32 0, 0
  %s34 = smul.u32 2, %s33
  %p35 = scmp.lt.s32.totalorder %s34, 1
  %s36 = scalar_select %p35, %s34, 1
  %s37 = smul.addr %s36, 8
  %s38 = scalar_lea.vmem %s1, %s37
  %s39 = sadd.s32 0, 0
  %s40 = smul.u32 2, %s39
  %p41 = scmp.lt.s32.totalorder %s40, 1
  %s42 = scalar_select %p41, %s40, 1
  %s43 = smul.addr %s42, 8
  %s44 = scalar_lea.vmem %s0, %s43
  %s45 = sadd.s32 0, 0
  %s46 = smul.u32 2, %s45
  %s47 = sadd.s32 0, 0
  %s48 = smul.u32 2, %s47
  %p49 = scmp.lt.s32.totalorder %s48, 1
  %s50 = scalar_select %p49, %s48, 1
  %s51 = smul.addr %s50, 8
  %s52 = scalar_lea.vmem %s1, %s51
  %s53 = sadd.s32 0, 0
  %s54 = smul.u32 2, %s53
  %p55 = scmp.eq.s32.totalorder 0, 0
  // Predicated region
  $region10: #{combined_loss.1} parent=0 // pred_check
    %p56 = pneg %p55
  $region11: #{combined_loss.1} parent=0 // pred_check_branch
    %58 = sbr.rel (%p56) target = $region13
  $region12: #{combined_loss.1} parent=0 // pred_region
    %59 = vst [vmem:[%s2] sm:$0xff] 0.0
    %60 = vst [vmem:[%s2 + $0x8] sm:$0xff] 0.0
    %61 = vst [vmem:[%s2 + $0x10] sm:$0xff] 0.0
    %62 = vst [vmem:[%s2 + $0x18] sm:$0xff] 0.0
  $region13: #{combined_loss.1} parent=0 // pred_fallthru
    _
  %v63 = vld [vmem:[%s44] sm:$0xff]
  %v64 = vld [vmem:[%s44 + $0x8] sm:$0xff]
  %v65 = vld [vmem:[%s52] sm:$0xff]
  %v66 = vld [vmem:[%s52 + $0x8] sm:$0xff]
  %v67 = vand.u32 2147483647, %v63
  %v68 = vand.u32 2147483647, %v64
  %v69 = vsub.f32 0.0, %v67
  %v70 = vsub.f32 0.0, %v68
  %v71 = vmul.f32 %v69, 1.442695
  %v72 = vpow.pop %v71
  %v73 = vmul.f32 %v70, 1.442695
  %v74 = vpow.pop %v73
  %v75 = vadd.f32 %v72, 1.0
  %v76 = vadd.f32 %v74, 1.0
  %v77 = vrcp.pop %v75
  %v78 = vrcp.pop %v76
  %vm79 = vcmp.ge.f32.partialorder %v63, 0.0
  %vm80 = vcmp.ge.f32.partialorder %v64, 0.0
  %v81 = vmul.f32 %v72, %v77
  %v82 = vmul.f32 %v74, %v78
  %v83 = vsel %vm79, %v77, %v81
  %v84 = vsel %vm80, %v78, %v82
  %v85 = vmax.f32 %v63, 0.0
  %v86 = vmax.f32 %v64, 0.0
  %v87 = vmul.f32 %v63, %v65
  %v88 = vmul.f32 %v64, %v66
  %v89 = vsub.f32 %v85, %v87
  %v90 = vsub.f32 %v86, %v88
  %v91 = vadd.f32 %v72, 1.0
  %v92 = vlog2.pop %v91
  %v93 = vmul.f32 %v92, 0.6931472
  %v94 = vmul.f32 -0.5, %v72
  %v95 = vadd.f32 %v94, 1.0
  %v96 = vmul.f32 %v95, %v72
  %v97 = vand.u32 2147483647, %v72
  %vm98 = vcmp.lt.f32.partialorder %v97, 0.0004427343
  %v99 = vsel %vm98, %v96, %v93
  %v100 = vadd.f32 %v74, 1.0
  %v101 = vlog2.pop %v100
  %v102 = vmul.f32 %v101, 0.6931472
  %v103 = vmul.f32 -0.5, %v74
  %v104 = vadd.f32 %v103, 1.0
  %v105 = vmul.f32 %v104, %v74
  %v106 = vand.u32 2147483647, %v74
  %vm107 = vcmp.lt.f32.partialorder %v106, 0.0004427343
  %v108 = vsel %vm107, %v105, %v102
  %v109 = vadd.f32 %v89, %v99
  %v110 = vadd.f32 %v90, %v108
  %v111 = vld [vmem:[%s2] sm:$0xff]
  %v112 = vadd.f32 %v109, %v110
  %v113 = vadd.f32 %v111, %v112
  %114 = vst [vmem:[%s2] sm:$0xff] %v113
  %s115 = scalar_lea.vmem %s2, 8
  %v116 = vld [vmem:[%s115] sm:$0xff]
  %v117 = vadd.f32 %v83, %v84
  %v118 = vadd.f32 %v116, %v117
  %119 = vst [vmem:[%s115] sm:$0xff] %v118
  %s120 = scalar_lea.vmem %s2, 16
  %v121 = vld [vmem:[%s120] sm:$0xff]
  %v122 = vadd.f32 %v65, %v66
  %v123 = vadd.f32 %v121, %v122
  %124 = vst [vmem:[%s120] sm:$0xff] %v123
  %s125 = scalar_lea.vmem %s2, 24
  %v126 = vld [vmem:[%s125] sm:$0xff]
  %v127 = vmul.f32 %v83, %v65
  %v128 = vmul.f32 %v84, %v66
  %v129 = vadd.f32 %v127, %v128
  %v130 = vadd.f32 %v126, %v129
  %131 = vst [vmem:[%s125] sm:$0xff] %v130
  // Predicated region
  $region14: #{combined_loss.1} parent=0 // pred_check
    _
  $region15: #{combined_loss.1} parent=0 // pred_check_branch
    %133 = sbr.rel (0) target = $region17
  $region16: #{combined_loss.1} parent=0 // pred_region
    _
  $region17: #{combined_loss.1} parent=0 // pred_fallthru
    _
  // Predicated region
  $region18: #{combined_loss.1} parent=0 // pred_check
    _
  $region19: #{combined_loss.1} parent=0 // pred_check_branch
    %135 = sbr.rel (0) target = $region21
  $region20: #{combined_loss.1} parent=0 // pred_region
    _
  $region21: #{combined_loss.1} parent=0 // pred_fallthru
    _

</llo_original>
